<compile_context>
chip_gen: v5e
topology: v5e:2x2
jax: 0.10.0
libtpu: 0.0.40
codegen_flags: <defaults>
</compile_context>

<pallas_src>
import functools

import numpy as np
import jax
import jax.numpy as jnp
from jax.experimental import pallas as pl
from jax.experimental.pallas import tpu as pltpu


def _gaussian_encode_kernel(x_ref, mu_ref, inv2s_ref, mu_kt_ref, lo_kt_ref,
                            hi_kt_ref, st_ref, spk_ref, *, max_spike_time):
    tm1 = float(max_spike_time - 1)
    x = x_ref[...]                                          # [TB, M] f32

    # ---- spike_time path (K on the lane axis): exact exp+round of the module.
    d = x[:, :, None] - mu_ref[...][None, :, :]             # [TB, M, K]
    g = jnp.exp(-(d * d) * inv2s_ref[...][None, :, :])
    st_ref[...] = jnp.round(tm1 - tm1 * g).astype(jnp.int32)

    # ---- out_spike path (K*T collapsed onto the lane axis, exp-free) --------
    # round((T-1)*(1 - exp(-d^2/(2 s^2)))) == t   <=>   lo[t] <= d^2 < hi[t]
    # with hi[t] = lo[t+1] and hi[T-1] = -inf (encodes the "last time slot is
    # always 0" rule).  5 VPU ops per out_spike byte: sub, mul, 2 cmps, and.
    dk = x[:, :, None] - mu_kt_ref[...][None, :, :]         # [TB, M, K*T]
    dk2 = dk * dk
    spk_ref[...] = (dk2 >= lo_kt_ref[...][None, :, :]) & \
                   (dk2 < hi_kt_ref[...][None, :, :])       # bool, stored as-is


def _vmem_plan():
    """(tile budget, scoped vmem limit) from the actual chip: v7x has only
    64 MiB VMEM per TensorCore, v5e/v6e have 128 MiB.  Request at most half of
    physical VMEM as the scoped limit and plan tiles for ~75% of it, leaving
    headroom for compiler temporaries / spill slots."""
    try:
        cap = pltpu.get_tpu_info().vmem_capacity_bytes
    except Exception:                   # conservative fallback (v7x per-core)
        cap = 64 * 1024 * 1024
    limit = int(min(cap // 2, 64 * 1024 * 1024))
    return (limit * 3) // 4, limit


def _pick_batch_tile(B, M, K, T, vmem_budget_bytes):
    """Batch tile sized from the real VMEM footprint: double-buffered in/out
    blocks, the grid-invariant parameter blocks, and the live f32 intermediates
    of the body (dk/dk2 on the K*T path dominate: ~8 bytes per out_spike byte).
    Always leaves >=2 (target ~8) grid steps so the 'parallel' batch axis can
    shard across v7x's two TensorCores and the out_spike writeback pipelines
    against compute."""
    KT = K * T
    fixed = 2 * (2 * M * K * 4 + 3 * M * KT * 4)            # invariant params (x2 buffers)
    block_row = 2 * (M * 4 + M * K * 4 + M * KT * 1)        # x + st + spk blocks (x2 buffers)
    temp_row = 2 * M * KT * 4 + M * KT * 1 + 3 * M * K * 4  # dk, dk2, bool cmp, d/g/st
    tb = max(1, (vmem_budget_bytes - fixed) // max(block_row + temp_row, 1))
    tb = min(tb, max(1, pl.cdiv(B, 8)), B)
    if tb >= 32:
        tb = (tb // 32) * 32    # int8 sublane tile (bool output), per review
    elif tb >= 8:
        tb = (tb // 8) * 8      # f32/int32 sublane tile
    return max(int(tb), 1)


def gaussian_tuning_curve_encode(x, mu, sigma, max_spike_time):
    """x: [B, M] float; mu: [M, K] float; sigma: [M] float.
    Returns (spike_time [B, M, K] int32, out_spike [B, M, K, T] bool),
    matching GaussianTuningCurveEncoder.forward."""
    B, M = x.shape
    K = mu.shape[1]
    T = int(max_spike_time)
    KT = K * T
    tm1 = float(T - 1)

    x32 = x.astype(jnp.float32)
    mu32 = mu.astype(jnp.float32)
    sigma32 = sigma.astype(jnp.float32)

    # spike_time path parameters: 1/(2 sigma^2), broadcast to [M, K] so the
    # kernel input is not a lane-wasting [M, 1] column.
    inv2s = jnp.broadcast_to((1.0 / (2.0 * sigma32 ** 2))[:, None], (M, K))

    # out_spike path parameters, lane-dense on K*T (flat index j = k*T + t):
    #   mu_kt[m, j] = mu[m, j // T]
    #   lo_kt[m, j] = -2 sigma[m]^2 * log(((T-1) - t + 0.5) / (T-1)),  t = j % T
    #   hi_kt[m, j] = lo of slot t+1, and -inf for t = T-1 (last slot off).
    # Log ratios in float64 so the thresholds only carry the final-multiply
    # rounding error.
    two_s2 = (2.0 * sigma32 ** 2)[:, None]                                # [M, 1]
    log_lo = np.log((tm1 - np.arange(T, dtype=np.float64) + 0.5) / tm1)   # [T]
    lo_t = -two_s2 * jnp.asarray(log_lo, dtype=jnp.float32)[None, :]      # [M, T]
    hi_t = jnp.concatenate(
        [lo_t[:, 1:], jnp.full((M, 1), -jnp.inf, jnp.float32)], axis=1)   # [M, T]
    mu_kt = jnp.repeat(mu32, T, axis=1)                                   # [M, K*T]
    lo_kt = jnp.tile(lo_t, (1, K))                                        # [M, K*T]
    hi_kt = jnp.tile(hi_t, (1, K))                                        # [M, K*T]

    budget, vmem_limit = _vmem_plan()
    TB = _pick_batch_tile(B, M, K, T, budget)
    grid = (pl.cdiv(B, TB),)
    # NOTE: if B % TB != 0 the last tile is ragged; padded rows run the cheap
    # elementwise math on stale buffer contents and are masked on writeback --
    # do not add reductions over a tile.

    kernel = functools.partial(_gaussian_encode_kernel, max_spike_time=T)

    cost = pl.CostEstimate(
        flops=int(B * M * K * 7 + B * M * KT * 5),
        transcendentals=int(B * M * K),
        bytes_accessed=int(B * M * 4 + B * M * K * 4 + B * M * KT
                           + 4 * (2 * M * K + 3 * M * KT)),
    )

    st, spk_flat = pl.pallas_call(
        kernel,
        out_shape=(
            jax.ShapeDtypeStruct((B, M, K), jnp.int32),
            jax.ShapeDtypeStruct((B, M, KT), jnp.bool_),
        ),
        grid=grid,
        in_specs=[
            pl.BlockSpec((TB, M), lambda i: (i, 0)),
            pl.BlockSpec((M, K), lambda i: (0, 0)),
            pl.BlockSpec((M, K), lambda i: (0, 0)),
            pl.BlockSpec((M, KT), lambda i: (0, 0)),
            pl.BlockSpec((M, KT), lambda i: (0, 0)),
            pl.BlockSpec((M, KT), lambda i: (0, 0)),
        ],
        out_specs=(
            pl.BlockSpec((TB, M, K), lambda i: (i, 0, 0)),
            pl.BlockSpec((TB, M, KT), lambda i: (i, 0, 0)),
        ),
        compiler_params=pltpu.CompilerParams(
            dimension_semantics=("parallel",),
            vmem_limit_bytes=vmem_limit,
        ),
        cost_estimate=cost,
    )(x32, mu32, inv2s, mu_kt, lo_kt, hi_kt)

    # Contiguous split of the minor dim -> free reshape, no data movement.
    return st, spk_flat.reshape(B, M, K, T)


def build_mu_sigma(x_min, x_max, tuning_curve_num):
    """Deterministic parameter setup mirroring GaussianTuningCurveEncoder.__init__.
    x_min, x_max: [M] arrays.  Returns mu [M, K], sigma [M]."""
    K = tuning_curve_num
    x_min = jnp.asarray(x_min, jnp.float32)
    x_max = jnp.asarray(x_max, jnp.float32)
    sigma = (1.0 / 1.5) * (x_max - x_min) / (K - 2)                      # [M]
    i = jnp.arange(K, dtype=jnp.float32)                                 # [K]
    mu = x_min[:, None] + (2.0 * i[None, :] - 3.0) / 2.0 * (
        (x_max - x_min)[:, None] / (K - 2))                              # [M, K]
    return mu, sigma


def _reference(x, mu, sigma, T):
    # Pure-JAX reference of the PyTorch forward (exp + round + one_hot, last
    # slot zeroed), using the same multiply-by-precomputed-inverse formulation.
    inv2s = 1.0 / (2.0 * sigma.astype(jnp.float32) ** 2)
    g = jnp.exp(-((x[:, :, None] - mu[None, :, :]) ** 2) * inv2s[None, :, None])
    st = jnp.round((T - 1.0) - (T - 1.0) * g).astype(jnp.int32)
    spk = jax.nn.one_hot(st, T, dtype=jnp.int32).astype(bool)
    spk = spk.at[:, :, :, -1].set(False)
    return st, spk


if __name__ == "__main__":
    B, M = 64, 4                 # batch_size, number of features
    tuning_curve_num = 8         # K (> 2)
    max_spike_time = 16          # T (> 1); K*T = 128 -> lane-dense out_spike

    key = jax.random.PRNGKey(0)
    x = jax.random.uniform(key, (B, M), dtype=jnp.float32)

    # As in the module docstring example: per-feature min/max of the data.
    x_min = x.min(axis=0)
    x_max = x.max(axis=0)
    mu, sigma = build_mu_sigma(x_min, x_max, tuning_curve_num)

    spike_time, out_spike = gaussian_tuning_curve_encode(x, mu, sigma, max_spike_time)
    jax.block_until_ready(spike_time)
    jax.block_until_ready(out_spike)

    st_ref, spk_ref = _reference(x, mu, sigma, max_spike_time)

    assert spike_time.shape == (B, M, tuning_curve_num)
    assert spike_time.dtype == jnp.int32
    assert out_spike.shape == (B, M, tuning_curve_num, max_spike_time)
    assert out_spike.dtype == jnp.bool_

    # spike_time uses the same exp+round formula as the reference; a deviation
    # can only be a single slot at an exact .5 rounding boundary (1-ulp exp
    # difference), so require <=1 slot and an essentially-zero mismatch rate.
    st_diff = jnp.abs(spike_time - st_ref)
    assert int(st_diff.max()) <= 1
    assert float((st_diff != 0).mean()) <= 1e-3

    # Structural invariants of the module's out_spike hold exactly:
    # at most one spike per neuron and never in the last time slot.
    assert int(out_spike[..., -1].sum()) == 0
    assert int(out_spike.sum(axis=-1).max()) <= 1

    # out_spike is the one-hot of spike_time; the exp-free threshold
    # formulation can only move a spike by one slot when the Gaussian value
    # lands exactly on a rounding boundary (measure-zero 1-ulp events), so
    # require row-exact agreement on >=99.9% of neurons, never >1 slot apart.
    row_ok = (out_spike == spk_ref).all(axis=-1)
    assert float(row_ok.mean()) >= 0.999
    spk_slot = jnp.where(out_spike.any(axis=-1),
                         jnp.argmax(out_spike, axis=-1), st_ref)
    assert int(jnp.abs(spk_slot - st_ref).max()) <= 1

    # TODO(synk): step()/reset() are host-side index bookkeeping over the
    # already-encoded out_spike tensor; they are not kernels.
    print("KERNEL_OK")
</pallas_src>

<mosaic_0001>
module attributes {stable_mosaic.version = 11 : i64} {
  func.func @_gaussian_encode_kernel(%arg0: i32, %arg1: memref<8x4xf32, #tpu.memory_space<vmem>>, %arg2: memref<4x8xf32, #tpu.memory_space<vmem>>, %arg3: memref<4x8xf32, #tpu.memory_space<vmem>>, %arg4: memref<4x128xf32, #tpu.memory_space<vmem>>, %arg5: memref<4x128xf32, #tpu.memory_space<vmem>>, %arg6: memref<4x128xf32, #tpu.memory_space<vmem>>, %arg7: memref<8x4x8xi32, #tpu.memory_space<vmem>>, %arg8: memref<8x4x128xi32, #tpu.memory_space<vmem>>) attributes {dimension_semantics = [#tpu.dimension_semantics<parallel>], iteration_bounds = array<i64: 8>, scalar_prefetch = 0 : i64, scratch_operands = 0 : i64, tpu.core_type = #tpu.core_type<tc>, window_params = [{transform_indices = @transform_0, window_bounds = array<i64: 8, 4>}, {pipeline_mode = #tpu.pipeline_mode<synchronous>, transform_indices = @transform_1, window_bounds = array<i64: 4, 8>}, {pipeline_mode = #tpu.pipeline_mode<synchronous>, transform_indices = @transform_2, window_bounds = array<i64: 4, 8>}, {pipeline_mode = #tpu.pipeline_mode<synchronous>, transform_indices = @transform_3, window_bounds = array<i64: 4, 128>}, {pipeline_mode = #tpu.pipeline_mode<synchronous>, transform_indices = @transform_4, window_bounds = array<i64: 4, 128>}, {pipeline_mode = #tpu.pipeline_mode<synchronous>, transform_indices = @transform_5, window_bounds = array<i64: 4, 128>}, {transform_indices = @transform_6, window_bounds = array<i64: 8, 4, 8>}, {transform_indices = @transform_7, window_bounds = array<i64: 8, 4, 128>}]} {
    %c0 = arith.constant 0 : index
    %c0_0 = arith.constant 0 : index
    %0 = vector.load %arg1[%c0, %c0_0] : memref<8x4xf32, #tpu.memory_space<vmem>>, vector<8x4xf32>
    %1 = vector.shape_cast %0 : vector<8x4xf32> to vector<8x4x1xf32>
    %c0_1 = arith.constant 0 : index
    %c0_2 = arith.constant 0 : index
    %2 = vector.load %arg2[%c0_1, %c0_2] : memref<4x8xf32, #tpu.memory_space<vmem>>, vector<4x8xf32>
    %3 = vector.shape_cast %2 : vector<4x8xf32> to vector<1x4x8xf32>
    %4 = vector.broadcast %1 : vector<8x4x1xf32> to vector<8x4x8xf32>
    %5 = vector.broadcast %3 : vector<1x4x8xf32> to vector<8x4x8xf32>
    %6 = arith.subf %4, %5 : vector<8x4x8xf32>
    %7 = arith.mulf %6, %6 : vector<8x4x8xf32>
    %cst = arith.constant 0.000000e+00 : f32
    %8 = vector.broadcast %cst : f32 to vector<8x4x8xf32>
    %9 = arith.subf %8, %7 : vector<8x4x8xf32>
    %c0_3 = arith.constant 0 : index
    %c0_4 = arith.constant 0 : index
    %10 = vector.load %arg3[%c0_3, %c0_4] : memref<4x8xf32, #tpu.memory_space<vmem>>, vector<4x8xf32>
    %11 = vector.shape_cast %10 : vector<4x8xf32> to vector<1x4x8xf32>
    %12 = vector.broadcast %11 : vector<1x4x8xf32> to vector<8x4x8xf32>
    %13 = arith.mulf %9, %12 : vector<8x4x8xf32>
    %14 = math.exp %13 : vector<8x4x8xf32>
    %cst_5 = arith.constant 1.500000e+01 : f32
    %15 = vector.broadcast %cst_5 : f32 to vector<8x4x8xf32>
    %16 = arith.mulf %15, %14 : vector<8x4x8xf32>
    %cst_6 = arith.constant 1.500000e+01 : f32
    %17 = vector.broadcast %cst_6 : f32 to vector<8x4x8xf32>
    %18 = arith.subf %17, %16 : vector<8x4x8xf32>
    %19 = math.roundeven %18 : vector<8x4x8xf32>
    %20 = arith.fptosi %19 : vector<8x4x8xf32> to vector<8x4x8xi32>
    %c0_7 = arith.constant 0 : index
    %c0_8 = arith.constant 0 : index
    %c0_9 = arith.constant 0 : index
    %21 = vector.load %arg7[%c0_7, %c0_8, %c0_9] : memref<8x4x8xi32, #tpu.memory_space<vmem>>, vector<8x4x8xi32>
    tpu.vector_store %arg7[%c0_7, %c0_8, %c0_9], %20 {strides = array<i32>} : memref<8x4x8xi32, #tpu.memory_space<vmem>>, vector<8x4x8xi32>,
    %22 = vector.shape_cast %0 : vector<8x4xf32> to vector<8x4x1xf32>
    %c0_10 = arith.constant 0 : index
    %c0_11 = arith.constant 0 : index
    %23 = vector.load %arg4[%c0_10, %c0_11] : memref<4x128xf32, #tpu.memory_space<vmem>>, vector<4x128xf32>
    %24 = vector.shape_cast %23 : vector<4x128xf32> to vector<1x4x128xf32>
    %25 = vector.broadcast %22 : vector<8x4x1xf32> to vector<8x4x128xf32>
    %26 = vector.broadcast %24 : vector<1x4x128xf32> to vector<8x4x128xf32>
    %27 = arith.subf %25, %26 : vector<8x4x128xf32>
    %28 = arith.mulf %27, %27 : vector<8x4x128xf32>
    %c0_12 = arith.constant 0 : index
    %c0_13 = arith.constant 0 : index
    %29 = vector.load %arg5[%c0_12, %c0_13] : memref<4x128xf32, #tpu.memory_space<vmem>>, vector<4x128xf32>
    %30 = vector.shape_cast %29 : vector<4x128xf32> to vector<1x4x128xf32>
    %31 = vector.broadcast %30 : vector<1x4x128xf32> to vector<8x4x128xf32>
    %32 = arith.cmpf oge, %28, %31 : vector<8x4x128xf32>
    %c0_14 = arith.constant 0 : index
    %c0_15 = arith.constant 0 : index
    %33 = vector.load %arg6[%c0_14, %c0_15] : memref<4x128xf32, #tpu.memory_space<vmem>>, vector<4x128xf32>
    %34 = vector.shape_cast %33 : vector<4x128xf32> to vector<1x4x128xf32>
    %35 = vector.broadcast %34 : vector<1x4x128xf32> to vector<8x4x128xf32>
    %36 = arith.cmpf olt, %28, %35 : vector<8x4x128xf32>
    %37 = arith.andi %32, %36 : vector<8x4x128xi1>
    %c0_16 = arith.constant 0 : index
    %c0_17 = arith.constant 0 : index
    %c0_18 = arith.constant 0 : index
    %38 = vector.load %arg8[%c0_16, %c0_17, %c0_18] : memref<8x4x128xi32, #tpu.memory_space<vmem>>, vector<8x4x128xi32>
    %39 = arith.extui %37 : vector<8x4x128xi1> to vector<8x4x128xi32>
    %cst_19 = arith.constant dense<0> : vector<8x4x128xi32>
    %40 = arith.cmpi ne, %38, %cst_19 : vector<8x4x128xi32>
    tpu.vector_store %arg8[%c0_16, %c0_17, %c0_18], %39 {strides = array<i32>} : memref<8x4x128xi32, #tpu.memory_space<vmem>>, vector<8x4x128xi32>,
    return
  }
  func.func @transform_0(%arg0: i32) -> (i32, i32) {
    %c0_i32 = arith.constant 0 : i32
    %c0_i32_0 = arith.constant 0 : i32
    return %arg0, %c0_i32 : i32, i32
  }
  func.func @transform_1(%arg0: i32) -> (i32, i32) {
    %c0_i32 = arith.constant 0 : i32
    %c0_i32_0 = arith.constant 0 : i32
    %c0_i32_1 = arith.constant 0 : i32
    return %c0_i32, %c0_i32_0 : i32, i32
  }
  func.func @transform_2(%arg0: i32) -> (i32, i32) {
    %c0_i32 = arith.constant 0 : i32
    %c0_i32_0 = arith.constant 0 : i32
    %c0_i32_1 = arith.constant 0 : i32
    return %c0_i32, %c0_i32_0 : i32, i32
  }
  func.func @transform_3(%arg0: i32) -> (i32, i32) {
    %c0_i32 = arith.constant 0 : i32
    %c0_i32_0 = arith.constant 0 : i32
    %c0_i32_1 = arith.constant 0 : i32
    return %c0_i32, %c0_i32_0 : i32, i32
  }
  func.func @transform_4(%arg0: i32) -> (i32, i32) {
    %c0_i32 = arith.constant 0 : i32
    %c0_i32_0 = arith.constant 0 : i32
    %c0_i32_1 = arith.constant 0 : i32
    return %c0_i32, %c0_i32_0 : i32, i32
  }
  func.func @transform_5(%arg0: i32) -> (i32, i32) {
    %c0_i32 = arith.constant 0 : i32
    %c0_i32_0 = arith.constant 0 : i32
    %c0_i32_1 = arith.constant 0 : i32
    return %c0_i32, %c0_i32_0 : i32, i32
  }
  func.func @transform_6(%arg0: i32) -> (i32, i32, i32) {
    %c0_i32 = arith.constant 0 : i32
    %c0_i32_0 = arith.constant 0 : i32
    %c0_i32_1 = arith.constant 0 : i32
    return %arg0, %c0_i32, %c0_i32_0 : i32, i32, i32
  }
  func.func @transform_7(%arg0: i32) -> (i32, i32, i32) {
    %c0_i32 = arith.constant 0 : i32
    %c0_i32_0 = arith.constant 0 : i32
    %c0_i32_1 = arith.constant 0 : i32
    return %arg0, %c0_i32, %c0_i32_0 : i32, i32, i32
  }
}

</mosaic_0001>

<llo_original>
// kernel: tpu_custom_call.1
$region0: #{tpu_custom_call.1}
  #allocation0 [shape = 'u32[]', space=smem, size = 0x4, offset = 0x4, fixed_abs, tag = 'smem constant byte address 0x4 - core index']
  #allocation1 [shape = 'u32[72,128]{1,0:T(1,128)}', space=vmem, size = 0x9000, scoped, tag = 'internal scratch']
  %s0 = inlined_call_operand.vmem [shape: f32[64,4], index: 0, kind: input, shape index: {}]
  %s1 = inlined_call_operand.vmem [shape: f32[4,8], index: 1, kind: input, shape index: {}]
  %s2 = inlined_call_operand.vmem [shape: f32[4,8], index: 2, kind: input, shape index: {}]
  %s3 = inlined_call_operand.vmem [shape: f32[4,128], index: 3, kind: input, shape index: {}]
  %s4 = inlined_call_operand.vmem [shape: f32[4,128], index: 4, kind: input, shape index: {}]
  %s5 = inlined_call_operand.vmem [shape: f32[4,128], index: 5, kind: input, shape index: {}]
  %s6 = inlined_call_operand.vmem [shape: s32[64,4,8], index: 6, kind: output, shape index: {0}]
  %s7 = inlined_call_operand.vmem [shape: s32[64,4,128], index: 7, kind: output, shape index: {1}]
  %8 = xla_tuple %s6, %s7
  %s9 = sld [smem:[#allocation0]]
  $region65: #{tpu_custom_call.1} parent=0
    _
  %s11 = ssub.s32 1, %s9
  %s12 = scalar_select 0, %s11, %s9
  loop: start=0, step=1, limit=10
  $region2: #{tpu_custom_call.1} parent=0 // loop_pre_header
    _
  $region3: #{tpu_custom_call.1} parent=0 // loop_header
    %s14 = sphi 0, %s18
    %p15 = scmp.ge.s32.totalorder %s14, 10
    %s24 = sphi 0, %s26
    %s27 = sphi 0, %s24
    %s28 = sphi 0, %s27
    %s44 = sphi 0, %s28
    %s48 = sphi 0, %s48
    %s50 = sphi 0, %s48
    %s51 = sphi 0, %s50
    %s65 = sphi 0, %s51
    %s69 = sphi 0, %s69
    %s71 = sphi 0, %s69
    %s72 = sphi 0, %s71
    %s86 = sphi 0, %s72
    %s90 = sphi 0, %s90
    %s92 = sphi 0, %s90
    %s93 = sphi 0, %s92
    %s107 = sphi 0, %s93
    %s111 = sphi 0, %s111
    %s113 = sphi 0, %s111
    %s114 = sphi 0, %s113
    %s128 = sphi 0, %s114
    %s132 = sphi 0, %s132
    %s134 = sphi 0, %s132
    %s135 = sphi 0, %s134
    %s149 = sphi 0, %s135
    %s155 = sphi 0, %s157
    %s158 = sphi 0, %s155
    %s159 = sphi 0, %s158
    %s175 = sphi 0, %s159
    %s181 = sphi 0, %s183
    %s184 = sphi 0, %s181
    %s185 = sphi 0, %s184
    %s201 = sphi 0, %s185
  $region4: #{tpu_custom_call.1} parent=0 // loop_header_branch
    %17 = sbr.rel (%p15) target = $region8
  $region5: #{tpu_custom_call.1} parent=0 // loop_body
    %s19 = ssub.s32 %s14, 1
    %s20 = ssub.s32 %s14, 2
    %s21 = sadd.s32 %s14, 1
    %s22 = ssub.s32 %s14, %s21
    %p23 = scmp.eq.s32.totalorder %s22, 0
    %s25 = sadd.s32 %s24, 1
    %s26 = scalar_select %p23, %s24, %s25
    %p29 = pneg %p23
    %p30 = scmp.eq.s32.totalorder %s14, 7
    %p31 = por %p29, %p30
    %p32 = scmp.ne.s32.totalorder %s24, %s27
    %p33 = scmp.eq.s32.totalorder %s14, 0
    %p34 = por %p32, %p33
    %p35 = scmp.ne.s32.totalorder %s24, %s27
    %p36 = scmp.eq.s32.totalorder %s19, 7
    %p37 = por %p35, %p36
    %p38 = scmp.ne.s32.totalorder %s27, %s28
    %p39 = scmp.eq.s32.totalorder %s19, 0
    %p40 = por %p38, %p39
    %p41 = scmp.ne.s32.totalorder %s27, %s28
    %p42 = scmp.eq.s32.totalorder %s20, 7
    %p43 = por %p41, %p42
    %p45 = scmp.ne.s32.totalorder %s28, %s44
    %p46 = scmp.eq.s32.totalorder %s20, 0
    %p47 = por %p45, %p46
    %s49 = sadd.s32 %s48, 1
    %p52 = scmp.eq.s32.totalorder %s14, 7
    %p53 = scmp.ne.s32.totalorder %s48, %s50
    %p54 = scmp.eq.s32.totalorder %s14, 0
    %p55 = por %p53, %p54
    %p56 = scmp.ne.s32.totalorder %s48, %s50
    %p57 = scmp.eq.s32.totalorder %s19, 7
    %p58 = por %p56, %p57
    %p59 = scmp.ne.s32.totalorder %s50, %s51
    %p60 = scmp.eq.s32.totalorder %s19, 0
    %p61 = por %p59, %p60
    %p62 = scmp.ne.s32.totalorder %s50, %s51
    %p63 = scmp.eq.s32.totalorder %s20, 7
    %p64 = por %p62, %p63
    %p66 = scmp.ne.s32.totalorder %s51, %s65
    %p67 = scmp.eq.s32.totalorder %s20, 0
    %p68 = por %p66, %p67
    %s70 = sadd.s32 %s69, 1
    %p73 = scmp.eq.s32.totalorder %s14, 7
    %p74 = scmp.ne.s32.totalorder %s69, %s71
    %p75 = scmp.eq.s32.totalorder %s14, 0
    %p76 = por %p74, %p75
    %p77 = scmp.ne.s32.totalorder %s69, %s71
    %p78 = scmp.eq.s32.totalorder %s19, 7
    %p79 = por %p77, %p78
    %p80 = scmp.ne.s32.totalorder %s71, %s72
    %p81 = scmp.eq.s32.totalorder %s19, 0
    %p82 = por %p80, %p81
    %p83 = scmp.ne.s32.totalorder %s71, %s72
    %p84 = scmp.eq.s32.totalorder %s20, 7
    %p85 = por %p83, %p84
    %p87 = scmp.ne.s32.totalorder %s72, %s86
    %p88 = scmp.eq.s32.totalorder %s20, 0
    %p89 = por %p87, %p88
    %s91 = sadd.s32 %s90, 1
    %p94 = scmp.eq.s32.totalorder %s14, 7
    %p95 = scmp.ne.s32.totalorder %s90, %s92
    %p96 = scmp.eq.s32.totalorder %s14, 0
    %p97 = por %p95, %p96
    %p98 = scmp.ne.s32.totalorder %s90, %s92
    %p99 = scmp.eq.s32.totalorder %s19, 7
    %p100 = por %p98, %p99
    %p101 = scmp.ne.s32.totalorder %s92, %s93
    %p102 = scmp.eq.s32.totalorder %s19, 0
    %p103 = por %p101, %p102
    %p104 = scmp.ne.s32.totalorder %s92, %s93
    %p105 = scmp.eq.s32.totalorder %s20, 7
    %p106 = por %p104, %p105
    %p108 = scmp.ne.s32.totalorder %s93, %s107
    %p109 = scmp.eq.s32.totalorder %s20, 0
    %p110 = por %p108, %p109
    %s112 = sadd.s32 %s111, 1
    %p115 = scmp.eq.s32.totalorder %s14, 7
    %p116 = scmp.ne.s32.totalorder %s111, %s113
    %p117 = scmp.eq.s32.totalorder %s14, 0
    %p118 = por %p116, %p117
    %p119 = scmp.ne.s32.totalorder %s111, %s113
    %p120 = scmp.eq.s32.totalorder %s19, 7
    %p121 = por %p119, %p120
    %p122 = scmp.ne.s32.totalorder %s113, %s114
    %p123 = scmp.eq.s32.totalorder %s19, 0
    %p124 = por %p122, %p123
    %p125 = scmp.ne.s32.totalorder %s113, %s114
    %p126 = scmp.eq.s32.totalorder %s20, 7
    %p127 = por %p125, %p126
    %p129 = scmp.ne.s32.totalorder %s114, %s128
    %p130 = scmp.eq.s32.totalorder %s20, 0
    %p131 = por %p129, %p130
    %s133 = sadd.s32 %s132, 1
    %p136 = scmp.eq.s32.totalorder %s14, 7
    %p137 = scmp.ne.s32.totalorder %s132, %s134
    %p138 = scmp.eq.s32.totalorder %s14, 0
    %p139 = por %p137, %p138
    %p140 = scmp.ne.s32.totalorder %s132, %s134
    %p141 = scmp.eq.s32.totalorder %s19, 7
    %p142 = por %p140, %p141
    %p143 = scmp.ne.s32.totalorder %s134, %s135
    %p144 = scmp.eq.s32.totalorder %s19, 0
    %p145 = por %p143, %p144
    %p146 = scmp.ne.s32.totalorder %s134, %s135
    %p147 = scmp.eq.s32.totalorder %s20, 7
    %p148 = por %p146, %p147
    %p150 = scmp.ne.s32.totalorder %s135, %s149
    %p151 = scmp.eq.s32.totalorder %s20, 0
    %p152 = por %p150, %p151
    %s153 = ssub.s32 %s14, %s21
    %p154 = scmp.eq.s32.totalorder %s153, 0
    %s156 = sadd.s32 %s155, 1
    %s157 = scalar_select %p154, %s155, %s156
    %p160 = pneg %p154
    %p161 = scmp.eq.s32.totalorder %s14, 7
    %p162 = por %p160, %p161
    %p163 = scmp.ne.s32.totalorder %s155, %s158
    %p164 = scmp.eq.s32.totalorder %s14, 0
    %p165 = por %p163, %p164
    %p166 = scmp.ne.s32.totalorder %s155, %s158
    %p167 = scmp.eq.s32.totalorder %s19, 7
    %p168 = por %p166, %p167
    %p169 = scmp.ne.s32.totalorder %s158, %s159
    %p170 = scmp.eq.s32.totalorder %s19, 0
    %p171 = por %p169, %p170
    %p172 = scmp.ne.s32.totalorder %s158, %s159
    %p173 = scmp.eq.s32.totalorder %s20, 7
    %p174 = por %p172, %p173
    %p176 = scmp.ne.s32.totalorder %s159, %s175
    %p177 = scmp.eq.s32.totalorder %s20, 0
    %p178 = por %p176, %p177
    %s179 = ssub.s32 %s14, %s21
    %p180 = scmp.eq.s32.totalorder %s179, 0
    %s182 = sadd.s32 %s181, 1
    %s183 = scalar_select %p180, %s181, %s182
    %p186 = pneg %p180
    %p187 = scmp.eq.s32.totalorder %s14, 7
    %p188 = por %p186, %p187
    %p189 = scmp.ne.s32.totalorder %s181, %s184
    %p190 = scmp.eq.s32.totalorder %s14, 0
    %p191 = por %p189, %p190
    %p192 = scmp.ne.s32.totalorder %s181, %s184
    %p193 = scmp.eq.s32.totalorder %s19, 7
    %p194 = por %p192, %p193
    %p195 = scmp.ne.s32.totalorder %s184, %s185
    %p196 = scmp.eq.s32.totalorder %s19, 0
    %p197 = por %p195, %p196
    %p198 = scmp.ne.s32.totalorder %s184, %s185
    %p199 = scmp.eq.s32.totalorder %s20, 7
    %p200 = por %p198, %p199
    %p202 = scmp.ne.s32.totalorder %s185, %s201
    %p203 = scmp.eq.s32.totalorder %s20, 0
    %p204 = por %p202, %p203
    %p205 = scmp.le.s32.totalorder 1, %s14
    %p206 = scmp.lt.s32.totalorder %s14, 9
    %p207 = pnand %p205, %p206
    %p208 = pneg %p207
    // Predicated region
    $region9: #{tpu_custom_call.1} parent=5 // pred_check
      _
    $region10: #{tpu_custom_call.1} parent=5 // pred_check_branch
      %210 = sbr.rel (%p207) target = $region12
    $region11: #{tpu_custom_call.1} parent=5 // pred_region
      %s211 = ssub.s32 %s14, 1
      // Predicated region
      $region13: #{tpu_custom_call.1} parent=11 // pred_check
        %p212 = pneg %p61
      $region14: #{tpu_custom_call.1} parent=11 // pred_check_branch
        %214 = sbr.rel (%p212) target = $region16
      $region15: #{tpu_custom_call.1} parent=11 // pred_region
        _
      $region16: #{tpu_custom_call.1} parent=11 // pred_fallthru
        _
      // Predicated region
      $region17: #{tpu_custom_call.1} parent=11 // pred_check
        %p215 = pneg %p82
      $region18: #{tpu_custom_call.1} parent=11 // pred_check_branch
        %217 = sbr.rel (%p215) target = $region20
      $region19: #{tpu_custom_call.1} parent=11 // pred_region
        _
      $region20: #{tpu_custom_call.1} parent=11 // pred_fallthru
        _
      // Predicated region
      $region21: #{tpu_custom_call.1} parent=11 // pred_check
        %p218 = pneg %p103
      $region22: #{tpu_custom_call.1} parent=11 // pred_check_branch
        %220 = sbr.rel (%p218) target = $region24
      $region23: #{tpu_custom_call.1} parent=11 // pred_region
        _
      $region24: #{tpu_custom_call.1} parent=11 // pred_fallthru
        _
      // Predicated region
      $region25: #{tpu_custom_call.1} parent=11 // pred_check
        %p221 = pneg %p124
      $region26: #{tpu_custom_call.1} parent=11 // pred_check_branch
        %223 = sbr.rel (%p221) target = $region28
      $region27: #{tpu_custom_call.1} parent=11 // pred_region
        _
      $region28: #{tpu_custom_call.1} parent=11 // pred_fallthru
        _
      // Predicated region
      $region29: #{tpu_custom_call.1} parent=11 // pred_check
        %p224 = pneg %p145
      $region30: #{tpu_custom_call.1} parent=11 // pred_check_branch
        %226 = sbr.rel (%p224) target = $region32
      $region31: #{tpu_custom_call.1} parent=11 // pred_region
        _
      $region32: #{tpu_custom_call.1} parent=11 // pred_fallthru
        _
    $region12: #{tpu_custom_call.1} parent=5 // pred_fallthru
      _
    %p227 = scmp.lt.s32.totalorder %s14, 8
    // Predicated region
    $region33: #{tpu_custom_call.1} parent=5 // pred_check
      %p228 = pneg %p227
    $region34: #{tpu_custom_call.1} parent=5 // pred_check_branch
      %230 = sbr.rel (%p228) target = $region36
    $region35: #{tpu_custom_call.1} parent=5 // pred_region
      // Predicated region
      $region37: #{tpu_custom_call.1} parent=35 // pred_check
        %p231 = pneg %p34
      $region38: #{tpu_custom_call.1} parent=35 // pred_check_branch
        %233 = sbr.rel (%p231) target = $region40
      $region39: #{tpu_custom_call.1} parent=35 // pred_region
        %p234 = scmp.lt.s32.totalorder %s14, 7
        %s235 = scalar_select %p234, %s14, 7
        %s236 = smul.addr %s235, 8
        %s237 = scalar_lea.vmem %s0, %s236
      $region40: #{tpu_custom_call.1} parent=35 // pred_fallthru
        _
    $region36: #{tpu_custom_call.1} parent=5 // pred_fallthru
      _
    %p238 = scmp.le.s32.totalorder 1, %s14
    %p239 = scmp.lt.s32.totalorder %s14, 9
    %p240 = pnand %p238, %p239
    %p241 = pneg %p240
    // Predicated region
    $region41: #{tpu_custom_call.1} parent=5 // pred_check
      _
    $region42: #{tpu_custom_call.1} parent=5 // pred_check_branch
      %243 = sbr.rel (%p240) target = $region44
    $region43: #{tpu_custom_call.1} parent=5 // pred_region
      %s244 = ssub.s32 %s14, 1
      %p245 = scmp.lt.s32.totalorder %s19, 7
      %s246 = scalar_select %p245, %s19, 7
      %s247 = smul.addr %s246, 8
      %s248 = scalar_lea.vmem %s0, %s247
      %p249 = pneg %p40
      %p250 = pneg %p37
      %p251 = pneg %p61
      %p252 = pneg %p58
      %p253 = pneg %p82
      %p254 = pneg %p79
      %p255 = pneg %p103
      %p256 = pneg %p100
      %p257 = pneg %p124
      %p258 = pneg %p121
      %p259 = pneg %p145
      %p260 = pneg %p142
      %p261 = pneg %p171
      %p262 = pneg %p168
      %s263 = smul.u32 8, %s19
      %p264 = scmp.lt.s32.totalorder %s263, 63
      %s265 = scalar_select %p264, %s263, 63
      %s266 = smul.addr %s265, 4
      %s267 = scalar_lea.vmem %s6, %s266
      %p268 = pneg %p197
      %p269 = pneg %p194
      %s270 = smul.u32 8, %s19
      %p271 = scmp.lt.s32.totalorder %s270, 63
      %s272 = scalar_select %p271, %s270, 63
      %s273 = smul.addr %s272, 4
      %s274 = scalar_lea.vmem %s7, %s273
      %p275 = scmp.lt.s32.totalorder %s19, 7
      %s276 = scalar_select %p275, %s19, 7
      %s277 = smul.addr %s276, 8
      %s278 = scalar_lea.vmem %s0, %s277
      %s279 = smul.u32 8, %s19
      %p280 = scmp.lt.s32.totalorder %s279, 63
      %s281 = scalar_select %p280, %s279, 63
      %s282 = smul.addr %s281, 4
      %s283 = scalar_lea.vmem %s6, %s282
      %s284 = smul.u32 8, %s19
      %s285 = smul.u32 8, %s19
      %p286 = scmp.lt.s32.totalorder %s285, 63
      %s287 = scalar_select %p286, %s285, 63
      %s288 = smul.addr %s287, 4
      %s289 = scalar_lea.vmem %s7, %s288
      %s290 = smul.u32 8, %s19
      %v291 = vld [vmem:[%s278] sm:$0xff]
      %v292 = vperm.slane %v291, 0
      %v293 = vlaneseq
      %v294 = vshrl.u32 %v293, 7
      %296 = vset.pattern.permute.xlu0 %v294
      %297 = vperm.xlu0 %296, %v292
      %v298 = vpop.permute.xlu0 %297
      %v299 = vperm.slane %v291, 1
      %v300 = vlaneseq
      %v301 = vshrl.u32 %v300, 7
      %303 = vset.pattern.permute.xlu0 %v301
      %304 = vperm.xlu0 %303, %v299
      %v305 = vpop.permute.xlu0 %304
      %v306 = vperm.slane %v291, 2
      %v307 = vlaneseq
      %v308 = vshrl.u32 %v307, 7
      %310 = vset.pattern.permute.xlu0 %v308
      %311 = vperm.xlu0 %310, %v306
      %v312 = vpop.permute.xlu0 %311
      %v313 = vperm.slane %v291, 3
      %v314 = vlaneseq
      %v315 = vshrl.u32 %v314, 7
      %317 = vset.pattern.permute.xlu0 %v315
      %318 = vperm.xlu0 %317, %v313
      %v319 = vpop.permute.xlu0 %318
      %v320 = vperm.slane %v291, 4
      %v321 = vlaneseq
      %v322 = vshrl.u32 %v321, 7
      %324 = vset.pattern.permute.xlu0 %v322
      %325 = vperm.xlu0 %324, %v320
      %v326 = vpop.permute.xlu0 %325
      %v327 = vperm.slane %v291, 5
      %v328 = vlaneseq
      %v329 = vshrl.u32 %v328, 7
      %331 = vset.pattern.permute.xlu0 %v329
      %332 = vperm.xlu0 %331, %v327
      %v333 = vpop.permute.xlu0 %332
      %v334 = vperm.slane %v291, 6
      %v335 = vlaneseq
      %v336 = vshrl.u32 %v335, 7
      %338 = vset.pattern.permute.xlu0 %v336
      %339 = vperm.xlu0 %338, %v334
      %v340 = vpop.permute.xlu0 %339
      %v341 = vperm.slane %v291, 7
      %v342 = vlaneseq
      %v343 = vshrl.u32 %v342, 7
      %345 = vset.pattern.permute.xlu0 %v343
      %346 = vperm.xlu0 %345, %v341
      %v347 = vpop.permute.xlu0 %346
      %v348 = vld [vmem:[%s1] sm:$0xf]
      %v349 = vsub.f32 %v298, %v348
      %v350 = vsub.f32 %v305, %v348
      %v351 = vsub.f32 %v312, %v348
      %v352 = vsub.f32 %v319, %v348
      %v353 = vsub.f32 %v326, %v348
      %v354 = vsub.f32 %v333, %v348
      %v355 = vsub.f32 %v340, %v348
      %v356 = vsub.f32 %v347, %v348
      %v357 = vmul.f32 %v349, %v349
      %v358 = vmul.f32 %v350, %v350
      %v359 = vmul.f32 %v351, %v351
      %v360 = vmul.f32 %v352, %v352
      %v361 = vmul.f32 %v353, %v353
      %v362 = vmul.f32 %v354, %v354
      %v363 = vmul.f32 %v355, %v355
      %v364 = vmul.f32 %v356, %v356
      %v365 = vsub.f32 0.0, %v357
      %v366 = vsub.f32 0.0, %v358
      %v367 = vsub.f32 0.0, %v359
      %v368 = vsub.f32 0.0, %v360
      %v369 = vsub.f32 0.0, %v361
      %v370 = vsub.f32 0.0, %v362
      %v371 = vsub.f32 0.0, %v363
      %v372 = vsub.f32 0.0, %v364
      %v373 = vld [vmem:[%s2] sm:$0xf]
      %v374 = vmul.f32 %v365, %v373
      %v375 = vmul.f32 %v366, %v373
      %v376 = vmul.f32 %v367, %v373
      %v377 = vmul.f32 %v368, %v373
      %v378 = vmul.f32 %v369, %v373
      %v379 = vmul.f32 %v370, %v373
      %v380 = vmul.f32 %v371, %v373
      %v381 = vmul.f32 %v372, %v373
      %v382 = vmul.f32 %v374, 1.442695
      %v383 = vpow.pop %v382
      %v384 = vmul.f32 %v375, 1.442695
      %v385 = vpow.pop %v384
      %v386 = vmul.f32 %v376, 1.442695
      %v387 = vpow.pop %v386
      %v388 = vmul.f32 %v377, 1.442695
      %v389 = vpow.pop %v388
      %v390 = vmul.f32 %v378, 1.442695
      %v391 = vpow.pop %v390
      %v392 = vmul.f32 %v379, 1.442695
      %v393 = vpow.pop %v392
      %v394 = vmul.f32 %v380, 1.442695
      %v395 = vpow.pop %v394
      %v396 = vmul.f32 %v381, 1.442695
      %v397 = vpow.pop %v396
      %v398 = vmul.f32 %v383, 15.0
      %v399 = vmul.f32 %v385, 15.0
      %v400 = vmul.f32 %v387, 15.0
      %v401 = vmul.f32 %v389, 15.0
      %v402 = vmul.f32 %v391, 15.0
      %v403 = vmul.f32 %v393, 15.0
      %v404 = vmul.f32 %v395, 15.0
      %v405 = vmul.f32 %v397, 15.0
      %v406 = vsub.f32 15.0, %v398
      %v407 = vsub.f32 15.0, %v399
      %v408 = vsub.f32 15.0, %v400
      %v409 = vsub.f32 15.0, %v401
      %v410 = vsub.f32 15.0, %v402
      %v411 = vsub.f32 15.0, %v403
      %v412 = vsub.f32 15.0, %v404
      %v413 = vsub.f32 15.0, %v405
      %v414 = vcvt.f32.s32.ties.to.even %v406
      %v415 = vcvt.f32.s32.ties.to.even %v407
      %v416 = vcvt.f32.s32.ties.to.even %v408
      %v417 = vcvt.f32.s32.ties.to.even %v409
      %v418 = vcvt.f32.s32.ties.to.even %v410
      %v419 = vcvt.f32.s32.ties.to.even %v411
      %v420 = vcvt.f32.s32.ties.to.even %v412
      %v421 = vcvt.f32.s32.ties.to.even %v413
      %vm422 = vcmask 60416
      %423 = vst.msk [vmem:[%s283] sm:$0xf] %vm422, %v414
      %424 = vst.msk [vmem:[%s283 + $0x4] sm:$0xf] %vm422, %v415
      %425 = vst.msk [vmem:[%s283 + $0x8] sm:$0xf] %vm422, %v416
      %426 = vst.msk [vmem:[%s283 + $0xc] sm:$0xf] %vm422, %v417
      %427 = vst.msk [vmem:[%s283 + $0x10] sm:$0xf] %vm422, %v418
      %428 = vst.msk [vmem:[%s283 + $0x14] sm:$0xf] %vm422, %v419
      %429 = vst.msk [vmem:[%s283 + $0x18] sm:$0xf] %vm422, %v420
      %430 = vst.msk [vmem:[%s283 + $0x1c] sm:$0xf] %vm422, %v421
      %v431 = vld [vmem:[%s3] sm:$0xf]
      %v432 = vsub.f32 %v298, %v431
      %v433 = vsub.f32 %v305, %v431
      %v434 = vsub.f32 %v312, %v431
      %v435 = vsub.f32 %v319, %v431
      %v436 = vsub.f32 %v326, %v431
      %v437 = vsub.f32 %v333, %v431
      %v438 = vsub.f32 %v340, %v431
      %v439 = vsub.f32 %v347, %v431
      %v440 = vmul.f32 %v432, %v432
      %v441 = vmul.f32 %v433, %v433
      %v442 = vmul.f32 %v434, %v434
      %v443 = vmul.f32 %v435, %v435
      %v444 = vmul.f32 %v436, %v436
      %v445 = vmul.f32 %v437, %v437
      %v446 = vmul.f32 %v438, %v438
      %v447 = vmul.f32 %v439, %v439
      %v448 = vld [vmem:[%s4] sm:$0xf]
      %vm449 = vcmp.ge.f32.partialorder %v440, %v448
      %vm450 = vcmp.ge.f32.partialorder %v441, %v448
      %vm451 = vcmp.ge.f32.partialorder %v442, %v448
      %vm452 = vcmp.ge.f32.partialorder %v443, %v448
      %vm453 = vcmp.ge.f32.partialorder %v444, %v448
      %vm454 = vcmp.ge.f32.partialorder %v445, %v448
      %vm455 = vcmp.ge.f32.partialorder %v446, %v448
      %vm456 = vcmp.ge.f32.partialorder %v447, %v448
      %v457 = vld [vmem:[%s5] sm:$0xf]
      %vm458 = vcmp.lt.f32.partialorder %v440, %v457
      %vm459 = vcmp.lt.f32.partialorder %v441, %v457
      %vm460 = vcmp.lt.f32.partialorder %v442, %v457
      %vm461 = vcmp.lt.f32.partialorder %v443, %v457
      %vm462 = vcmp.lt.f32.partialorder %v444, %v457
      %vm463 = vcmp.lt.f32.partialorder %v445, %v457
      %vm464 = vcmp.lt.f32.partialorder %v446, %v457
      %vm465 = vcmp.lt.f32.partialorder %v447, %v457
      %vm466 = vmand %vm449, %vm458
      %vm467 = vmand %vm450, %vm459
      %vm468 = vmand %vm451, %vm460
      %vm469 = vmand %vm452, %vm461
      %vm470 = vmand %vm453, %vm462
      %vm471 = vmand %vm454, %vm463
      %vm472 = vmand %vm455, %vm464
      %vm473 = vmand %vm456, %vm465
      %v474 = vsel %vm466, 1, 0
      %v475 = vsel %vm467, 1, 0
      %v476 = vsel %vm468, 1, 0
      %v477 = vsel %vm469, 1, 0
      %v478 = vsel %vm470, 1, 0
      %v479 = vsel %vm471, 1, 0
      %v480 = vsel %vm472, 1, 0
      %v481 = vsel %vm473, 1, 0
      %482 = vst [vmem:[%s289] sm:$0xf] %v474
      %483 = vst [vmem:[%s289 + $0x4] sm:$0xf] %v475
      %484 = vst [vmem:[%s289 + $0x8] sm:$0xf] %v476
      %485 = vst [vmem:[%s289 + $0xc] sm:$0xf] %v477
      %486 = vst [vmem:[%s289 + $0x10] sm:$0xf] %v478
      %487 = vst [vmem:[%s289 + $0x14] sm:$0xf] %v479
      %488 = vst [vmem:[%s289 + $0x18] sm:$0xf] %v480
      %489 = vst [vmem:[%s289 + $0x1c] sm:$0xf] %v481
      %s490 = smul.u32 8, %s19
      %p491 = scmp.lt.s32.totalorder %s490, 63
      %s492 = scalar_select %p491, %s490, 63
      %s493 = smul.addr %s492, 4
      %s494 = scalar_lea.vmem %s6, %s493
      %s495 = smul.u32 8, %s19
      %p496 = scmp.lt.s32.totalorder %s495, 63
      %s497 = scalar_select %p496, %s495, 63
      %s498 = smul.addr %s497, 4
      %s499 = scalar_lea.vmem %s7, %s498
      // Predicated region
      $region45: #{tpu_custom_call.1} parent=43 // pred_check
        %p500 = pneg %p168
      $region46: #{tpu_custom_call.1} parent=43 // pred_check_branch
        %502 = sbr.rel (%p500) target = $region48
      $region47: #{tpu_custom_call.1} parent=43 // pred_region
        %s503 = smul.u32 8, %s19
      $region48: #{tpu_custom_call.1} parent=43 // pred_fallthru
        _
      // Predicated region
      $region49: #{tpu_custom_call.1} parent=43 // pred_check
        %p504 = pneg %p194
      $region50: #{tpu_custom_call.1} parent=43 // pred_check_branch
        %506 = sbr.rel (%p504) target = $region52
      $region51: #{tpu_custom_call.1} parent=43 // pred_region
        %s507 = smul.u32 8, %s19
      $region52: #{tpu_custom_call.1} parent=43 // pred_fallthru
        _
    $region44: #{tpu_custom_call.1} parent=5 // pred_fallthru
      _
    %p508 = scmp.le.s32.totalorder 2, %s14
    // Predicated region
    $region53: #{tpu_custom_call.1} parent=5 // pred_check
      %p509 = pneg %p508
    $region54: #{tpu_custom_call.1} parent=5 // pred_check_branch
      %511 = sbr.rel (%p509) target = $region56
    $region55: #{tpu_custom_call.1} parent=5 // pred_region
      %s512 = ssub.s32 %s14, 2
      // Predicated region
      $region57: #{tpu_custom_call.1} parent=55 // pred_check
        %p513 = pneg %p174
      $region58: #{tpu_custom_call.1} parent=55 // pred_check_branch
        %515 = sbr.rel (%p513) target = $region60
      $region59: #{tpu_custom_call.1} parent=55 // pred_region
        %s516 = smul.u32 8, %s20
        %p517 = scmp.lt.s32.totalorder %s516, 63
        %s518 = scalar_select %p517, %s516, 63
        %s519 = smul.addr %s518, 4
        %s520 = scalar_lea.vmem %s6, %s519
      $region60: #{tpu_custom_call.1} parent=55 // pred_fallthru
        _
      // Predicated region
      $region61: #{tpu_custom_call.1} parent=55 // pred_check
        %p521 = pneg %p200
      $region62: #{tpu_custom_call.1} parent=55 // pred_check_branch
        %523 = sbr.rel (%p521) target = $region64
      $region63: #{tpu_custom_call.1} parent=55 // pred_region
        %s524 = smul.u32 8, %s20
        %p525 = scmp.lt.s32.totalorder %s524, 63
        %s526 = scalar_select %p525, %s524, 63
        %s527 = smul.addr %s526, 4
        %s528 = scalar_lea.vmem %s7, %s527
      $region64: #{tpu_custom_call.1} parent=55 // pred_fallthru
        _
    $region56: #{tpu_custom_call.1} parent=5 // pred_fallthru
      _
  $region6: #{tpu_custom_call.1} parent=0 // loop_footer
    %s18 = sadd.s32 1, %s14
  $region7: #{tpu_custom_call.1} parent=0 // loop_footer_branch
    %13 = sbr.rel target = $region3
  $region8: #{tpu_custom_call.1} parent=0 // loop_exit
    _

</llo_original>
